<compile_context>
chip_gen: v7x
topology: tpu7x:2x2x1
jax: 0.10.0
libtpu: 0.0.40
codegen_flags: <defaults>
</compile_context>

<pallas_src>
import numpy as np

import jax
import jax.numpy as jnp
from jax.experimental import pallas as pl
from jax.experimental.pallas import tpu as pltpu

_LANES = 384  # 3 * 128: one row = 128 complete (S, I, R) triples, lane-dense.


def _sir_kernel(coef_ref, y_ref, out_ref):
    # y_ref / out_ref: (rblk, 384) tiles of the interleaved [S,I,R,S,I,R,...]
    # stream.  coef_ref: (4, 384) per-lane coefficients (a, b, c, d) with
    # beta/gamma already folded in (see sir_forward).
    y = y_ref[...].astype(jnp.float32)            # (rblk, C), one dense load
    n_lanes = y.shape[-1]
    # Lane rolls within each row (rows hold whole triples, so the wrap lanes
    # are an S lane for the +1 roll and an R lane for the -1 roll, and their
    # coefficients are exactly 0 there).
    y_prev = pltpu.roll(y, 1, axis=1)             # y[j-1]
    y_next = pltpu.roll(y, n_lanes - 1, axis=1)   # y[j+1]

    a = coef_ref[0:1, :]   # -beta  on S lanes, 0 elsewhere
    b = coef_ref[1:2, :]   # +beta  on I lanes, 0 elsewhere
    c = coef_ref[2:3, :]   # -gamma on I lanes, 0 elsewhere
    d = coef_ref[3:4, :]   # +gamma on R lanes, 0 elsewhere

    # S lane: y*(a*y_next)        = -beta*S*I
    # I lane: y*(b*y_prev + c)    =  beta*S*I - gamma*I
    # R lane: d*y_prev            =  gamma*I
    out = y * (a * y_next + b * y_prev + c) + d * y_prev
    out_ref[...] = out.astype(out_ref.dtype)      # one dense store


def _round_up(x, m):
    return -(-x // m) * m


def sir_forward(t, y, beta, gamma, *, block_rows=1024):
    """Pallas equivalent of SIRModel(beta, gamma).forward(t, y).

    t is accepted for API parity with the PyTorch module but (as there) unused.
    y: [..., 3] array, last axis = (S, I, R); returns d/dt with the same shape
    and dtype.  beta/gamma may be Python floats or traced JAX scalars.
    """
    del t  # unused, same as the reference module
    orig_shape = y.shape
    assert orig_shape[-1] == 3, "last axis must hold (S, I, R)"
    dtype = y.dtype
    C = _LANES

    total = int(np.prod(orig_shape))      # always a multiple of 3
    flat = y.reshape(-1)                  # free (contiguous view)
    rows = -(-total // C)
    pad = rows * C - total
    if pad:
        # Only taken when batch % 128 != 0: one extra HBM pass to round the
        # flat stream up to whole 128-triple rows.
        flat = jnp.pad(flat, (0, pad))
    y2d = flat.reshape(rows, C)           # free (contiguous view)

    # Tile rows: as large as possible (amortize ~0.35us/step pipeline
    # overhead) while still giving >= 2 grid steps when possible (v7x has two
    # TensorCores).  rblk is a multiple of 8 or the full row count.
    if rows <= 16:
        rblk = rows
    else:
        rblk = min(block_rows, _round_up(-(-rows // 2), 8))
    grid = -(-rows // rblk)

    # Per-lane coefficients (lane role pattern is static; beta/gamma are
    # runtime values -> no recompile per parameter value, tracers allowed).
    m = np.arange(C) % 3                  # 0 = S lane, 1 = I lane, 2 = R lane
    coef = jnp.stack([
        jnp.where(m == 0, -beta, 0.0),    # a
        jnp.where(m == 1, beta, 0.0),     # b
        jnp.where(m == 1, -gamma, 0.0),   # c
        jnp.where(m == 2, gamma, 0.0),    # d
    ]).astype(jnp.float32)                # (4, C), tiny

    out2d = pl.pallas_call(
        _sir_kernel,
        out_shape=jax.ShapeDtypeStruct((rows, C), dtype),
        grid=(grid,),
        in_specs=[
            pl.BlockSpec((4, C), lambda i: (0, 0)),      # coefficients (resident)
            pl.BlockSpec((rblk, C), lambda i: (i, 0)),   # state tiles
        ],
        out_specs=pl.BlockSpec((rblk, C), lambda i: (i, 0)),
        compiler_params=pltpu.CompilerParams(
            dimension_semantics=("parallel",),
            vmem_limit_bytes=32 * 1024 * 1024,
        ),
    )(coef, y2d)

    out_flat = out2d.reshape(-1)          # free
    if pad:
        out_flat = out_flat[:total]       # extra pass only in the padded case
    return out_flat.reshape(orig_shape)   # free


def _sir_reference(t, y, beta, gamma):
    del t
    S, I = y[..., 0], y[..., 1]
    dSdt = -beta * S * I
    dIdt = beta * S * I - gamma * I
    dRdt = gamma * I
    return jnp.stack([dSdt, dIdt, dRdt], axis=-1)


if __name__ == "__main__":
    key = jax.random.PRNGKey(0)
    beta, gamma = 0.3, 0.1
    t = jnp.float32(0.0)  # unused, kept for signature parity

    # Small deterministic cases covering: tiny batch (pad path), leading dims,
    # 128-aligned batch (zero-copy path), and a multi-tile ragged-row case.
    cases = [(8, 3), (2, 150, 3), (256, 3), (5197, 3)]
    for i, shape in enumerate(cases):
        yk = jax.random.uniform(jax.random.fold_in(key, i), shape,
                                dtype=jnp.float32)
        out = jax.block_until_ready(sir_forward(t, yk, beta, gamma))
        ref = _sir_reference(t, yk, beta, gamma)
        assert out.shape == yk.shape and out.dtype == yk.dtype
        assert jnp.allclose(out, ref, rtol=1e-5, atol=1e-6), f"mismatch {shape}"

    print("KERNEL_OK")
</pallas_src>

<mosaic_0001>
module attributes {stable_mosaic.version = 11 : i64} {
  func.func @_sir_kernel(%arg0: i32, %arg1: memref<4x384xf32, #tpu.memory_space<vmem>>, %arg2: memref<1x384xf32, #tpu.memory_space<vmem>>, %arg3: memref<1x384xf32, #tpu.memory_space<vmem>>) attributes {dimension_semantics = [#tpu.dimension_semantics<parallel>], iteration_bounds = array<i64: 1>, scalar_prefetch = 0 : i64, scratch_operands = 0 : i64, tpu.core_type = #tpu.core_type<tc>, window_params = [{pipeline_mode = #tpu.pipeline_mode<synchronous>, transform_indices = @transform_0, window_bounds = array<i64: 4, 384>}, {transform_indices = @transform_1, window_bounds = array<i64: 1, 384>}, {transform_indices = @transform_2, window_bounds = array<i64: 1, 384>}]} {
    %c0 = arith.constant 0 : index
    %c0_0 = arith.constant 0 : index
    %0 = vector.load %arg2[%c0, %c0_0] : memref<1x384xf32, #tpu.memory_space<vmem>>, vector<1x384xf32>
    %c1_i32 = arith.constant 1 : i32
    %1 = tpu.dynamic_rotate %0 by %c1_i32 dim 1 : vector<1x384xf32>, i32 -> vector<1x384xf32>
    %c383_i32 = arith.constant 383 : i32
    %2 = tpu.dynamic_rotate %0 by %c383_i32 dim 1 : vector<1x384xf32>, i32 -> vector<1x384xf32>
    %c0_1 = arith.constant 0 : index
    %c0_2 = arith.constant 0 : index
    %3 = vector.load %arg1[%c0_1, %c0_2] : memref<4x384xf32, #tpu.memory_space<vmem>>, vector<1x384xf32>
    %c1 = arith.constant 1 : index
    %c0_3 = arith.constant 0 : index
    %4 = vector.load %arg1[%c1, %c0_3] : memref<4x384xf32, #tpu.memory_space<vmem>>, vector<1x384xf32>
    %c2 = arith.constant 2 : index
    %c0_4 = arith.constant 0 : index
    %5 = vector.load %arg1[%c2, %c0_4] : memref<4x384xf32, #tpu.memory_space<vmem>>, vector<1x384xf32>
    %c3 = arith.constant 3 : index
    %c0_5 = arith.constant 0 : index
    %6 = vector.load %arg1[%c3, %c0_5] : memref<4x384xf32, #tpu.memory_space<vmem>>, vector<1x384xf32>
    %7 = arith.mulf %3, %2 : vector<1x384xf32>
    %8 = arith.mulf %4, %1 : vector<1x384xf32>
    %9 = arith.addf %7, %8 : vector<1x384xf32>
    %10 = arith.addf %9, %5 : vector<1x384xf32>
    %11 = arith.mulf %0, %10 : vector<1x384xf32>
    %12 = arith.mulf %6, %1 : vector<1x384xf32>
    %13 = arith.addf %11, %12 : vector<1x384xf32>
    %c0_6 = arith.constant 0 : index
    %c0_7 = arith.constant 0 : index
    %14 = vector.load %arg3[%c0_6, %c0_7] : memref<1x384xf32, #tpu.memory_space<vmem>>, vector<1x384xf32>
    tpu.vector_store %arg3[%c0_6, %c0_7], %13 {strides = array<i32>} : memref<1x384xf32, #tpu.memory_space<vmem>>, vector<1x384xf32>,
    return
  }
  func.func @transform_0(%arg0: i32) -> (i32, i32) {
    %c0_i32 = arith.constant 0 : i32
    %c0_i32_0 = arith.constant 0 : i32
    %c0_i32_1 = arith.constant 0 : i32
    return %c0_i32, %c0_i32_0 : i32, i32
  }
  func.func @transform_1(%arg0: i32) -> (i32, i32) {
    %c0_i32 = arith.constant 0 : i32
    %c0_i32_0 = arith.constant 0 : i32
    return %arg0, %c0_i32 : i32, i32
  }
  func.func @transform_2(%arg0: i32) -> (i32, i32) {
    %c0_i32 = arith.constant 0 : i32
    %c0_i32_0 = arith.constant 0 : i32
    return %arg0, %c0_i32 : i32, i32
  }
}

</mosaic_0001>

<llo_original>
// kernel: tpu_custom_call.1
$region0: #{tpu_custom_call.1}
  #allocation0 [shape = 'u32[]', space=smem, size = 0x4, offset = 0x4, fixed_abs, tag = 'smem constant byte address 0x4 - core index']
  #allocation1 [shape = 'u32[144,128]{1,0:T(1,128)}', space=vmem, size = 0x12000, scoped, tag = 'internal scratch']
  %s0 = inlined_call_operand.hbm [shape: f32[4,384], index: 0, kind: input, shape index: {}]
  %s1 = inlined_call_operand.vmem [shape: f32[1,384], index: 1, kind: input, shape index: {}]
  %s2 = inlined_call_operand.hbm [shape: f32[1,384], index: 2, kind: output, shape index: {}]
  %s3 = sld [smem:[#allocation0]]
  $region22: #{tpu_custom_call.1} parent=0
    _
  %s5 = ssub.s32 1, %s3
  %s6 = scalar_select 0, %s5, %s3
  $region1: #{tpu_custom_call.1} parent=0
    #allocation2 [shape = 'u8[6144]{0}', space=vmem, size = 0x1800, scoped, tag = 'input window, operand 0, single buffered']
    #allocation3 [shape = 's32[1]{0}', space=sflag, size = 0x4, scoped, tag = 'scoped memory for tpu_custom_call.1']
    #allocation4 [shape = 's32[1]{0}', space=sflag, size = 0x4, scoped, tag = 'scoped memory for tpu_custom_call.1']
    #allocation5 [shape = 'u8[1536]{0}', space=vmem, size = 0x800, scoped, tag = 'output window, operand 0, single buffered']
    %7 = vsyncpa [#allocation3], 0
    %8 = vsyncpa [#allocation4], 0
    // Predicated region
    $region2: #{tpu_custom_call.1} parent=1 // pred_check
      _
    $region3: #{tpu_custom_call.1} parent=1 // pred_check_branch
      %10 = sbr.rel (0) target = $region5
    $region4: #{tpu_custom_call.1} parent=1 // pred_region
      %s12 = ssub.s32 192, 192
      %13 = vsyncadd [#allocation3], %s12
      %s15 = sshll.u32 [#allocation2], 4
      %s16 = int_to_ptr.vmem [resolvable:$true] %s15
      %18 = dma.hbm_to_vmem [thread:$0]  %s0, 192, %s16, [#allocation3]
    $region5: #{tpu_custom_call.1} parent=1 // pred_fallthru
      _
    // Predicated region
    $region6: #{tpu_custom_call.1} parent=1 // pred_check
      _
    $region7: #{tpu_custom_call.1} parent=1 // pred_check_branch
      %20 = sbr.rel (0) target = $region9
    $region8: #{tpu_custom_call.1} parent=1 // pred_region
      _
    $region9: #{tpu_custom_call.1} parent=1 // pred_fallthru
      _
    // Predicated region
    $region10: #{tpu_custom_call.1} parent=1 // pred_check
      _
    $region11: #{tpu_custom_call.1} parent=1 // pred_check_branch
      %22 = sbr.rel (0) target = $region13
    $region12: #{tpu_custom_call.1} parent=1 // pred_region
      %23 = dma.done [#allocation3], 192
    $region13: #{tpu_custom_call.1} parent=1 // pred_fallthru
      _
    %v24 = vld [vmem:[%s1] sm:$0x7]
    %v26 = vlaneseq
    %v27 = vshrl.u32 %v26, 7
    %v28 = vsub.s32 0, %v27
    %v29 = vrot.slane %v24, %v28
    %v30 = vlaneseq
    %v31 = vshrl.u32 %v30, 7
    %v32 = vsub.s32 1, %v31
    %v33 = vrot.slane %v24, %v32
    %v34 = vlaneseq
    %v35 = vshrl.u32 %v34, 7
    %v36 = vsub.s32 2, %v35
    %v37 = vrot.slane %v24, %v36
    %41 = vrot.lane.b32.xlu0 %v29, 1
    %v42 = vpop.permute.xlu0 %41
    %43 = vrot.lane.b32.xlu0 %v33, 1
    %v44 = vpop.permute.xlu0 %43
    %45 = vrot.lane.b32.xlu0 %v37, 1
    %v46 = vpop.permute.xlu0 %45
    %v47 = vlaneseq
    %v48 = vand.u32 %v47, 127
    %vm49 = vcmp.lt.s32.totalorder %v48, 1
    %v50 = vsel %vm49, %v44, %v46
    %v51 = vsel %vm49, %v42, %v44
    %v52 = vsel %vm49, %v46, %v42
    %53 = vrot.lane.b32.xlu0 %v29, 127
    %v54 = vpop.permute.xlu0 %53
    %55 = vrot.lane.b32.xlu0 %v33, 127
    %v56 = vpop.permute.xlu0 %55
    %57 = vrot.lane.b32.xlu0 %v37, 127
    %v58 = vpop.permute.xlu0 %57
    %vm59 = vcmp.lt.s32.totalorder %v48, 127
    %v60 = vsel %vm59, %v56, %v58
    %v61 = vsel %vm59, %v54, %v56
    %v62 = vsel %vm59, %v58, %v54
    %v63 = vld [vmem:[#allocation2] ss:$4 sm:$0x7]
    %s64 = scalar_lea.vmem [#allocation2], 1
    %v65 = vld [vmem:[%s64] ss:$4 sm:$0x7]
    %s66 = scalar_lea.vmem [#allocation2], 2
    %v67 = vld [vmem:[%s66] ss:$4 sm:$0x7]
    %s68 = scalar_lea.vmem [#allocation2], 3
    %v69 = vld [vmem:[%s68] ss:$4 sm:$0x7]
    %v73 = vcombine.low %v61, %v60
    %v75 = vunpack.c.l.s4 1966171168
    %v76 = vunpack.c.0.s8 %v75
    %v77 = vlaneseq
    %v78 = vshrl.u32 %v77, 7
    %v79 = vsub.s32 %v76, %v78
    %v80 = vrot.slane %v73, %v79
    %v82 = vunpack.c.l.s4 1966171168
    %v83 = vunpack.c.0.s8 %v82
    %v84 = vlaneseq
    %v85 = vshrl.u32 %v84, 7
    %v86 = vsub.s32 %v83, %v85
    %v87 = vrot.slane %v62, %v86
    %v88 = vcombine.low %v80, %v87
    %v90 = vunpack.c.l.s4 1966171168
    %v91 = vunpack.c.0.s8 %v90
    %v92 = vlaneseq
    %v93 = vshrl.u32 %v92, 7
    %v94 = vsub.s32 %v91, %v93
    %v95 = vrot.slane %v88, %v94
    %v97 = vmul.f32 %v63, %v95
    %v101 = vcombine.low %v52, %v51
    %v103 = vunpack.c.l.s4 1966171168
    %v104 = vunpack.c.0.s8 %v103
    %v105 = vlaneseq
    %v106 = vshrl.u32 %v105, 7
    %v107 = vsub.s32 %v104, %v106
    %v108 = vrot.slane %v101, %v107
    %v110 = vunpack.c.l.s4 1966171168
    %v111 = vunpack.c.0.s8 %v110
    %v112 = vlaneseq
    %v113 = vshrl.u32 %v112, 7
    %v114 = vsub.s32 %v111, %v113
    %v115 = vrot.slane %v50, %v114
    %v116 = vcombine.low %v108, %v115
    %v118 = vunpack.c.l.s4 1966171168
    %v119 = vunpack.c.0.s8 %v118
    %v120 = vlaneseq
    %v121 = vshrl.u32 %v120, 7
    %v122 = vsub.s32 %v119, %v121
    %v123 = vrot.slane %v116, %v122
    %v125 = vmul.f32 %v65, %v123
    %v126 = vadd.f32 %v97, %v125
    %v127 = vadd.f32 %v126, %v67
    %v128 = vmul.f32 %v24, %v127
    %v129 = vmul.f32 %v69, %v123
    %v130 = vadd.f32 %v128, %v129
    %v131 = vlaneseq
    %vm132 = vcmp.ge.s32.totalorder %v131, 0
    %vm133 = vcmp.lt.s32.totalorder %v131, 384
    %vm134 = vmand %vm132, %vm133
    %135 = vst.msk [vmem:[#allocation5] sm:$0x7] %vm134, %v130
    // Predicated region
    $region14: #{tpu_custom_call.1} parent=1 // pred_check
      _
    $region15: #{tpu_custom_call.1} parent=1 // pred_check_branch
      %137 = sbr.rel (0) target = $region17
    $region16: #{tpu_custom_call.1} parent=1 // pred_region
      %s139 = ssub.s32 48, 48
      %140 = vsyncadd [#allocation4], %s139
      %s142 = sshll.u32 [#allocation5], 4
      %s143 = int_to_ptr.vmem [resolvable:$true] %s142
      %145 = dma.vmem_to_hbm [thread:$0]  %s143, 48, %s2, [#allocation4]
    $region17: #{tpu_custom_call.1} parent=1 // pred_fallthru
      _
    // Predicated region
    $region18: #{tpu_custom_call.1} parent=1 // pred_check
      _
    $region19: #{tpu_custom_call.1} parent=1 // pred_check_branch
      %147 = sbr.rel (0) target = $region21
    $region20: #{tpu_custom_call.1} parent=1 // pred_region
      %148 = dma.done [#allocation4], 48
    $region21: #{tpu_custom_call.1} parent=1 // pred_fallthru
      _
    %149 = vsyncpa [#allocation3], 1
    %150 = vsyncpa [#allocation4], 1

</llo_original>
